<compile_context>
chip_gen: v6e
topology: v6e:2x2x1
jax: 0.10.0
libtpu: 0.0.40
codegen_flags: <defaults>
</compile_context>

<pallas_src>
import jax
import jax.numpy as jnp
from jax.experimental import pallas as pl
from jax.experimental.pallas import tpu as pltpu


def _pooler_kernel(x_ref, w_ref, b_ref, o_ref, acc_ref):
    # Grid = (N_tiles, K_tiles); K is the last (reduction) axis.
    # x_ref: [B_pad, tk]  (compute dtype)
    # w_ref: [tk, tn]     (compute dtype, already W.T layout -> no transpose)
    # b_ref: [1, tn]      (f32)
    # o_ref: [B_pad, tn]  (output dtype)
    # acc_ref: [B_pad, tn] f32 scratch accumulator
    k = pl.program_id(1)

    @pl.when(k == 0)
    def _init():
        acc_ref[...] = jnp.zeros_like(acc_ref)

    acc_ref[...] += jnp.dot(
        x_ref[...], w_ref[...], preferred_element_type=jnp.float32
    )

    @pl.when(k == pl.num_programs(1) - 1)
    def _finalize():
        y = acc_ref[...] + b_ref[...]          # bias add (VPU), f32
        o_ref[...] = jnp.tanh(y).astype(o_ref.dtype)   # tanh (EUP), f32


def _pick_tile(dim: int, want: int) -> int:
    """Largest tile <= want that is a multiple of 128 and divides dim;
    falls back to the full (always-legal) extent."""
    want = min(want, dim)
    if want == dim:
        return dim
    cand = (want // 128) * 128
    while cand >= 128:
        if dim % cand == 0:
            return cand
        cand -= 128
    return dim


def linear_pooler(hidden_states, weight, bias, *,
                  block_n: int = 512, block_k: int = 512,
                  compute_dtype=jnp.bfloat16):
    """hidden_states: [B, S, H]; weight: [H_out, H_in]; bias: [H] -> [B, H]."""
    B, S, H = hidden_states.shape
    out_dtype = hidden_states.dtype

    # ---- glue (tiny, fused by XLA): CLS slice, sublane padding, layouts ----
    x = hidden_states[:, 0, :]                                   # [B, H]
    g = 16 if jnp.dtype(compute_dtype) == jnp.dtype(jnp.bfloat16) else 8
    B_pad = ((B + g - 1) // g) * g
    if B_pad != B:
        x = jnp.pad(x, ((0, B_pad - B), (0, 0)))
    x = x.astype(compute_dtype)
    # nn.Linear: y = x @ W.T  ->  pass W.T ([H_in, H_out]) so the kernel does
    # a plain [M,K]@[K,N] matmul with no in-kernel transpose.
    wt = weight.T.astype(compute_dtype)                          # [K, N]
    b2d = bias.astype(jnp.float32).reshape(1, H)                 # f32 epilogue

    tn = _pick_tile(H, block_n)
    tk = _pick_tile(H, block_k)
    grid = (H // tn, H // tk)                                    # (N, K)

    w_bytes = jnp.dtype(compute_dtype).itemsize
    o_bytes = jnp.dtype(out_dtype).itemsize
    cost = pl.CostEstimate(
        flops=2 * B_pad * H * H,
        transcendentals=B_pad * H,
        bytes_accessed=H * H * w_bytes + B_pad * H * w_bytes + B_pad * H * o_bytes,
    )

    out = pl.pallas_call(
        _pooler_kernel,
        out_shape=jax.ShapeDtypeStruct((B_pad, H), out_dtype),
        grid_spec=pltpu.PrefetchScalarGridSpec(
            num_scalar_prefetch=0,
            grid=grid,
            in_specs=[
                pl.BlockSpec((B_pad, tk), lambda n, k: (0, k)),   # x
                pl.BlockSpec((tk, tn),    lambda n, k: (k, n)),   # W.T tile
                pl.BlockSpec((1, tn),     lambda n, k: (0, n)),   # bias
            ],
            out_specs=pl.BlockSpec((B_pad, tn), lambda n, k: (0, n)),
            scratch_shapes=[pltpu.VMEM((B_pad, tn), jnp.float32)],
        ),
        compiler_params=pltpu.CompilerParams(
            dimension_semantics=("parallel", "arbitrary"),
        ),
        cost_estimate=cost,
    )(x, wt, b2d)

    return out[:B]


if __name__ == "__main__":
    B, S, H = 2, 8, 256
    key = jax.random.PRNGKey(0)
    k_x, k_w, k_b = jax.random.split(key, 3)

    hidden_states = jax.random.normal(k_x, (B, S, H), dtype=jnp.float32)
    # Deterministic synthetic nn.Linear(H, H) parameters.
    weight = jax.random.normal(k_w, (H, H), dtype=jnp.float32) * 0.02
    bias = jax.random.normal(k_b, (H,), dtype=jnp.float32) * 0.02

    ref = jnp.tanh(
        jnp.einsum("bh,oh->bo", hidden_states[:, 0, :], weight,
                   precision=jax.lax.Precision.HIGHEST) + bias)

    # 1) Gridded path (2x2 grid), f32 compute: tight numerical check.
    out_f32 = linear_pooler(hidden_states, weight, bias,
                            block_n=128, block_k=128,
                            compute_dtype=jnp.float32)
    jax.block_until_ready(out_f32)
    assert out_f32.shape == (B, H)
    assert jnp.allclose(out_f32, ref, atol=2e-3, rtol=2e-3)

    # 2) Gridded path (2x2 grid), default bf16 operands / f32 accumulation.
    out_bf16 = linear_pooler(hidden_states, weight, bias,
                             block_n=128, block_k=128)
    jax.block_until_ready(out_bf16)
    assert out_bf16.shape == (B, H)
    assert jnp.allclose(out_bf16, ref, atol=5e-2, rtol=5e-2)

    # 3) Default tile sizes (falls back to a single full-H tile at this size).
    out_def = linear_pooler(hidden_states, weight, bias)
    jax.block_until_ready(out_def)
    assert out_def.shape == (B, H)
    assert jnp.allclose(out_def, ref, atol=5e-2, rtol=5e-2)

    print("KERNEL_OK")
</pallas_src>

<mosaic_0001>
module attributes {stable_mosaic.version = 11 : i64} {
  func.func @_pooler_kernel(%arg0: i32, %arg1: i32, %arg2: memref<8x128xf32, #tpu.memory_space<vmem>>, %arg3: memref<128x128xf32, #tpu.memory_space<vmem>>, %arg4: memref<1x128xf32, #tpu.memory_space<vmem>>, %arg5: memref<8x128xf32, #tpu.memory_space<vmem>>, %arg6: memref<8x128xf32, #tpu.memory_space<vmem>>) attributes {dimension_semantics = [#tpu.dimension_semantics<parallel>, #tpu.dimension_semantics<arbitrary>], iteration_bounds = array<i64: 2, 2>, scalar_prefetch = 0 : i64, scratch_operands = 1 : i64, tpu.core_type = #tpu.core_type<tc>, window_params = [{transform_indices = @transform_0, window_bounds = array<i64: 8, 128>}, {transform_indices = @transform_1, window_bounds = array<i64: 128, 128>}, {transform_indices = @transform_2, window_bounds = array<i64: 1, 128>}, {transform_indices = @transform_3, window_bounds = array<i64: 8, 128>}]} {
    %c0_i32 = arith.constant 0 : i32
    %0 = arith.cmpi eq, %arg1, %c0_i32 : i32
    %1 = arith.extui %0 : i1 to i32
    %c0_i32_0 = arith.constant 0 : i32
    %2 = arith.cmpi ne, %1, %c0_i32_0 : i32
    scf.if %2 {
      %cst_9 = arith.constant 0.000000e+00 : f32
      %12 = vector.broadcast %cst_9 : f32 to vector<8x128xf32>
      %c0_10 = arith.constant 0 : index
      %c0_11 = arith.constant 0 : index
      %13 = vector.load %arg6[%c0_10, %c0_11] : memref<8x128xf32, #tpu.memory_space<vmem>>, vector<8x128xf32>
      tpu.vector_store %arg6[%c0_10, %c0_11], %12 {strides = array<i32>} : memref<8x128xf32, #tpu.memory_space<vmem>>, vector<8x128xf32>,
    } else {
    }
    %c0 = arith.constant 0 : index
    %c0_1 = arith.constant 0 : index
    %3 = vector.load %arg6[%c0, %c0_1] : memref<8x128xf32, #tpu.memory_space<vmem>>, vector<8x128xf32>
    %c0_2 = arith.constant 0 : index
    %c0_3 = arith.constant 0 : index
    %4 = vector.load %arg2[%c0_2, %c0_3] : memref<8x128xf32, #tpu.memory_space<vmem>>, vector<8x128xf32>
    %c0_4 = arith.constant 0 : index
    %c0_5 = arith.constant 0 : index
    %5 = vector.load %arg3[%c0_4, %c0_5] : memref<128x128xf32, #tpu.memory_space<vmem>>, vector<128x128xf32>
    %cst = arith.constant dense<0.000000e+00> : vector<8x128xf32>
    %6 = tpu.matmul %4, %5, %cst {dimension_numbers = #tpu.dot_dimension_numbers<[1], [0], [0], [1], [0, 0, 1, 1], [], []>} : vector<8x128xf32>, vector<128x128xf32>, vector<8x128xf32> -> vector<8x128xf32>
    %7 = arith.addf %3, %6 : vector<8x128xf32>
    %c0_6 = arith.constant 0 : index
    %c0_7 = arith.constant 0 : index
    %8 = vector.load %arg6[%c0_6, %c0_7] : memref<8x128xf32, #tpu.memory_space<vmem>>, vector<8x128xf32>
    tpu.vector_store %arg6[%c0_6, %c0_7], %7 {strides = array<i32>} : memref<8x128xf32, #tpu.memory_space<vmem>>, vector<8x128xf32>,
    %c1_i32 = arith.constant 1 : i32
    %9 = arith.cmpi eq, %arg1, %c1_i32 : i32
    %10 = arith.extui %9 : i1 to i32
    %c0_i32_8 = arith.constant 0 : i32
    %11 = arith.cmpi ne, %10, %c0_i32_8 : i32
    scf.if %11 {
      %c0_9 = arith.constant 0 : index
      %c0_10 = arith.constant 0 : index
      %12 = vector.load %arg6[%c0_9, %c0_10] : memref<8x128xf32, #tpu.memory_space<vmem>>, vector<8x128xf32>
      %c0_11 = arith.constant 0 : index
      %c0_12 = arith.constant 0 : index
      %13 = vector.load %arg4[%c0_11, %c0_12] : memref<1x128xf32, #tpu.memory_space<vmem>>, vector<1x128xf32>
      %14 = vector.broadcast %13 : vector<1x128xf32> to vector<8x128xf32>
      %15 = arith.addf %12, %14 : vector<8x128xf32>
      %16 = math.tanh %15 : vector<8x128xf32>
      %c0_13 = arith.constant 0 : index
      %c0_14 = arith.constant 0 : index
      %17 = vector.load %arg5[%c0_13, %c0_14] : memref<8x128xf32, #tpu.memory_space<vmem>>, vector<8x128xf32>
      tpu.vector_store %arg5[%c0_13, %c0_14], %16 {strides = array<i32>} : memref<8x128xf32, #tpu.memory_space<vmem>>, vector<8x128xf32>,
    } else {
    }
    return
  }
  func.func @transform_0(%arg0: i32, %arg1: i32) -> (i32, i32) {
    %c0_i32 = arith.constant 0 : i32
    %c0_i32_0 = arith.constant 0 : i32
    return %c0_i32, %arg1 : i32, i32
  }
  func.func @transform_1(%arg0: i32, %arg1: i32) -> (i32, i32) {
    %c0_i32 = arith.constant 0 : i32
    return %arg1, %arg0 : i32, i32
  }
  func.func @transform_2(%arg0: i32, %arg1: i32) -> (i32, i32) {
    %c0_i32 = arith.constant 0 : i32
    %c0_i32_0 = arith.constant 0 : i32
    return %c0_i32, %arg0 : i32, i32
  }
  func.func @transform_3(%arg0: i32, %arg1: i32) -> (i32, i32) {
    %c0_i32 = arith.constant 0 : i32
    %c0_i32_0 = arith.constant 0 : i32
    return %c0_i32, %arg0 : i32, i32
  }
}

</mosaic_0001>

<llo_original>
// kernel: tpu_custom_call.1
$region0: #{tpu_custom_call.1}
  #allocation0 [shape = 'u32[]', space=smem, size = 0x4, offset = 0x4, fixed_abs, tag = 'smem constant byte address 0x4 - core index']
  #allocation1 [shape = 'u32[144,128]{1,0:T(1,128)}', space=vmem, size = 0x12000, scoped, tag = 'internal scratch']
  #allocation2 [shape = 'f32[8,128]{1,0:T(8,128)}', space=vmem, size = 0x1000, scoped, tag = 'scratch operand']
  %s0 = inlined_call_operand.hbm [shape: f32[8,256], index: 0, kind: input, shape index: {}]
  %s1 = inlined_call_operand.hbm [shape: f32[256,256], index: 1, kind: input, shape index: {}]
  %s2 = inlined_call_operand.vmem [shape: f32[1,256], index: 2, kind: input, shape index: {}]
  %s3 = inlined_call_operand.hbm [shape: f32[8,256], index: 3, kind: output, shape index: {}]
  %s4 = sld [smem:[#allocation0]]
  $region61: #{tpu_custom_call.1} parent=0
    _
  %s6 = ssub.s32 1, %s4
  %s7 = scalar_select 0, %s6, %s4
  $region1: #{tpu_custom_call.1} parent=0
    #allocation3 [shape = 'u8[8192]{0}', space=vmem, size = 0x2000, scoped, tag = 'input window, operand 0']
    #allocation4 [shape = 's32[2]{0}', space=sflag, size = 0x8, scoped, tag = 'scoped memory for tpu_custom_call.1']
    #allocation5 [shape = 's32[2]{0}', space=sflag, size = 0x8, scoped, tag = 'scoped memory for tpu_custom_call.1']
    #allocation6 [shape = 'u8[131072]{0}', space=vmem, size = 0x20000, scoped, tag = 'input window, operand 1']
    #allocation7 [shape = 's32[2]{0}', space=sflag, size = 0x8, scoped, tag = 'scoped memory for tpu_custom_call.1']
    #allocation8 [shape = 'u8[8192]{0}', space=vmem, size = 0x2000, scoped, tag = 'output window, operand 0']
    %8 = vsyncpa [#allocation4], 0
    %s9 = scalar_lea.sflag [#allocation4], 1
    %10 = vsyncpa %s9, 0
    %11 = vsyncpa [#allocation7], 0
    %s12 = scalar_lea.sflag [#allocation7], 1
    %13 = vsyncpa %s12, 0
    %14 = vsyncpa [#allocation5], 0
    %s15 = scalar_lea.sflag [#allocation5], 1
    %16 = vsyncpa %s15, 0
    loop: start=0, step=1, limit=6
    $region2: #{tpu_custom_call.1} parent=1 // loop_pre_header
      _
    $region3: #{tpu_custom_call.1} parent=1 // loop_header
      %s18 = sphi 0, %s22
      %p19 = scmp.ge.s32.totalorder %s18, 6
      %s25 = sphi 0, %s37
      %s26 = sphi 0, %s33
      %s27 = sphi 0, %s25
      %s28 = sphi 0, %s26
      %s29 = sphi 0, %s27
      %s30 = sphi 0, %s28
      %s40 = sphi 0, %s42
      %s43 = sphi 0, %s40
      %s44 = sphi 0, %s43
      %s60 = sphi 0, %s44
      %s68 = sphi 0, %s70
      %s71 = sphi 0, %s68
      %s72 = sphi 0, %s71
      %s88 = sphi 0, %s72
      %s94 = sphi 0, %s96
      %s97 = sphi 0, %s94
      %s98 = sphi 0, %s97
      %s114 = sphi 0, %s98
      %s120 = sphi 0, %s122
      %s123 = sphi 0, %s120
      %s124 = sphi 0, %s123
      %s140 = sphi 0, %s124
    $region4: #{tpu_custom_call.1} parent=1 // loop_header_branch
      %21 = sbr.rel (%p19) target = $region8
    $region5: #{tpu_custom_call.1} parent=1 // loop_body
      %s23 = ssub.s32 %s18, 1
      %s24 = ssub.s32 %s18, 2
      %s31 = sadd.s32 1, %s26
      %p32 = scmp.ge.s32.totalorder %s31, 2
      %s33 = scalar_select %p32, 0, %s31
      %s34 = sadd.s32 1, %s25
      %s35 = scalar_select %p32, %s34, %s25
      %p36 = scmp.ge.s32.totalorder %s35, 2
      %s37 = scalar_select %p36, 0, %s35
      %s38 = ssub.s32 %s26, %s33
      %p39 = scmp.eq.s32.totalorder %s38, 0
      %s41 = sadd.s32 %s40, 1
      %s42 = scalar_select %p39, %s40, %s41
      %p45 = pneg %p39
      %p46 = scmp.eq.s32.totalorder %s18, 3
      %p47 = por %p45, %p46
      %p48 = scmp.ne.s32.totalorder %s40, %s43
      %p49 = scmp.eq.s32.totalorder %s18, 0
      %p50 = por %p48, %p49
      %p51 = scmp.ne.s32.totalorder %s40, %s43
      %p52 = scmp.eq.s32.totalorder %s23, 3
      %p53 = por %p51, %p52
      %p54 = scmp.ne.s32.totalorder %s43, %s44
      %p55 = scmp.eq.s32.totalorder %s23, 0
      %p56 = por %p54, %p55
      %p57 = scmp.ne.s32.totalorder %s43, %s44
      %p58 = scmp.eq.s32.totalorder %s24, 3
      %p59 = por %p57, %p58
      %p61 = scmp.ne.s32.totalorder %s44, %s60
      %p62 = scmp.eq.s32.totalorder %s24, 0
      %p63 = por %p61, %p62
      %s64 = ssub.s32 %s26, %s33
      %s65 = ssub.s32 %s25, %s37
      %s66 = sor.u32 %s64, %s65
      %p67 = scmp.eq.s32.totalorder %s66, 0
      %s69 = sadd.s32 %s68, 1
      %s70 = scalar_select %p67, %s68, %s69
      %p73 = pneg %p67
      %p74 = scmp.eq.s32.totalorder %s18, 3
      %p75 = por %p73, %p74
      %p76 = scmp.ne.s32.totalorder %s68, %s71
      %p77 = scmp.eq.s32.totalorder %s18, 0
      %p78 = por %p76, %p77
      %p79 = scmp.ne.s32.totalorder %s68, %s71
      %p80 = scmp.eq.s32.totalorder %s23, 3
      %p81 = por %p79, %p80
      %p82 = scmp.ne.s32.totalorder %s71, %s72
      %p83 = scmp.eq.s32.totalorder %s23, 0
      %p84 = por %p82, %p83
      %p85 = scmp.ne.s32.totalorder %s71, %s72
      %p86 = scmp.eq.s32.totalorder %s24, 3
      %p87 = por %p85, %p86
      %p89 = scmp.ne.s32.totalorder %s72, %s88
      %p90 = scmp.eq.s32.totalorder %s24, 0
      %p91 = por %p89, %p90
      %s92 = ssub.s32 %s25, %s37
      %p93 = scmp.eq.s32.totalorder %s92, 0
      %s95 = sadd.s32 %s94, 1
      %s96 = scalar_select %p93, %s94, %s95
      %p99 = pneg %p93
      %p100 = scmp.eq.s32.totalorder %s18, 3
      %p101 = por %p99, %p100
      %p102 = scmp.ne.s32.totalorder %s94, %s97
      %p103 = scmp.eq.s32.totalorder %s18, 0
      %p104 = por %p102, %p103
      %p105 = scmp.ne.s32.totalorder %s94, %s97
      %p106 = scmp.eq.s32.totalorder %s23, 3
      %p107 = por %p105, %p106
      %p108 = scmp.ne.s32.totalorder %s97, %s98
      %p109 = scmp.eq.s32.totalorder %s23, 0
      %p110 = por %p108, %p109
      %p111 = scmp.ne.s32.totalorder %s97, %s98
      %p112 = scmp.eq.s32.totalorder %s24, 3
      %p113 = por %p111, %p112
      %p115 = scmp.ne.s32.totalorder %s98, %s114
      %p116 = scmp.eq.s32.totalorder %s24, 0
      %p117 = por %p115, %p116
      %s118 = ssub.s32 %s25, %s37
      %p119 = scmp.eq.s32.totalorder %s118, 0
      %s121 = sadd.s32 %s120, 1
      %s122 = scalar_select %p119, %s120, %s121
      %p125 = pneg %p119
      %p126 = scmp.eq.s32.totalorder %s18, 3
      %p127 = por %p125, %p126
      %p128 = scmp.ne.s32.totalorder %s120, %s123
      %p129 = scmp.eq.s32.totalorder %s18, 0
      %p130 = por %p128, %p129
      %p131 = scmp.ne.s32.totalorder %s120, %s123
      %p132 = scmp.eq.s32.totalorder %s23, 3
      %p133 = por %p131, %p132
      %p134 = scmp.ne.s32.totalorder %s123, %s124
      %p135 = scmp.eq.s32.totalorder %s23, 0
      %p136 = por %p134, %p135
      %p137 = scmp.ne.s32.totalorder %s123, %s124
      %p138 = scmp.eq.s32.totalorder %s24, 3
      %p139 = por %p137, %p138
      %p141 = scmp.ne.s32.totalorder %s124, %s140
      %p142 = scmp.eq.s32.totalorder %s24, 0
      %p143 = por %p141, %p142
      %p144 = scmp.le.s32.totalorder 1, %s18
      %p145 = scmp.lt.s32.totalorder %s18, 5
      %p146 = pnand %p144, %p145
      %p147 = pneg %p146
      // Predicated region
      $region9: #{tpu_custom_call.1} parent=5 // pred_check
        _
      $region10: #{tpu_custom_call.1} parent=5 // pred_check_branch
        %149 = sbr.rel (%p146) target = $region12
      $region11: #{tpu_custom_call.1} parent=5 // pred_region
        %s150 = ssub.s32 %s18, 1
      $region12: #{tpu_custom_call.1} parent=5 // pred_fallthru
        _
      %p151 = scmp.lt.s32.totalorder %s18, 4
      // Predicated region
      $region13: #{tpu_custom_call.1} parent=5 // pred_check
        %p152 = pneg %p151
      $region14: #{tpu_custom_call.1} parent=5 // pred_check_branch
        %154 = sbr.rel (%p152) target = $region16
      $region15: #{tpu_custom_call.1} parent=5 // pred_region
        // Predicated region
        $region17: #{tpu_custom_call.1} parent=15 // pred_check
          %p155 = pneg %p50
        $region18: #{tpu_custom_call.1} parent=15 // pred_check_branch
          %157 = sbr.rel (%p155) target = $region20
        $region19: #{tpu_custom_call.1} parent=15 // pred_region
          %s158 = sand.u32 %s40, 1
          %s159 = scalar_lea.sflag [#allocation4], %s158
          %s160 = sand.u32 %s40, 1
          %s161 = smul.addr %s160, 8
          %s162 = scalar_lea.vmem [#allocation3], %s161
          %s164 = ssub.s32 128, 128
          %165 = vsyncadd %s159, %s164
          %s166 = smul.addr %s26, 128
          %s167 = scalar_lea.hbm %s0, %s166
          %s169 = sshll.u32 %s162, 4
          %s170 = int_to_ptr.vmem [resolvable:$true] %s169
          %172 = dma.hbm_to_vmem [thread:$0]  %s167, 128, %s170, %s159
        $region20: #{tpu_custom_call.1} parent=15 // pred_fallthru
          _
        // Predicated region
        $region21: #{tpu_custom_call.1} parent=15 // pred_check
          %p173 = pneg %p78
        $region22: #{tpu_custom_call.1} parent=15 // pred_check_branch
          %175 = sbr.rel (%p173) target = $region24
        $region23: #{tpu_custom_call.1} parent=15 // pred_region
          %s176 = sand.u32 %s68, 1
          %s177 = scalar_lea.sflag [#allocation7], %s176
          %s178 = sand.u32 %s68, 1
          %s179 = smul.addr %s178, 128
          %s180 = scalar_lea.vmem [#allocation6], %s179
          %s181 = smul.u32 16, %s26
          %s183 = ssub.s32 2048, 2048
          %184 = vsyncadd %s177, %s183
          %s185 = smul.addr %s181, 2
          %s186 = sadd.s32 %s25, %s185
          %s187 = smul.addr %s186, 128
          %s188 = scalar_lea.hbm %s1, %s187
          %s189 = sshll.u32 %s180, 4
          %s190 = int_to_ptr.vmem [resolvable:$true] %s189
          %195 = dma.hbm_to_vmem [thread:$0]  %s188, 2048, %s190, %s177, 256, 128, 8
        $region24: #{tpu_custom_call.1} parent=15 // pred_fallthru
          _
        // Predicated region
        $region25: #{tpu_custom_call.1} parent=15 // pred_check
          %p196 = pneg %p104
        $region26: #{tpu_custom_call.1} parent=15 // pred_check_branch
          %198 = sbr.rel (%p196) target = $region28
        $region27: #{tpu_custom_call.1} parent=15 // pred_region
          %p199 = scmp.lt.s32.totalorder %s25, 1
          %s200 = scalar_select %p199, %s25, 1
          %s201 = scalar_lea.vmem %s2, %s200
        $region28: #{tpu_custom_call.1} parent=15 // pred_fallthru
          _
      $region16: #{tpu_custom_call.1} parent=5 // pred_fallthru
        _
      %p202 = scmp.le.s32.totalorder 1, %s18
      %p203 = scmp.lt.s32.totalorder %s18, 5
      %p204 = pnand %p202, %p203
      %p205 = pneg %p204
      // Predicated region
      $region29: #{tpu_custom_call.1} parent=5 // pred_check
        _
      $region30: #{tpu_custom_call.1} parent=5 // pred_check_branch
        %207 = sbr.rel (%p204) target = $region32
      $region31: #{tpu_custom_call.1} parent=5 // pred_region
        %s208 = ssub.s32 %s18, 1
        %s209 = sand.u32 %s43, 1
        %s210 = scalar_lea.sflag [#allocation4], %s209
        %s211 = sand.u32 %s43, 1
        %s212 = smul.addr %s211, 8
        %s213 = scalar_lea.vmem [#allocation3], %s212
        // Predicated region
        $region33: #{tpu_custom_call.1} parent=31 // pred_check
          %p214 = pneg %p56
        $region34: #{tpu_custom_call.1} parent=31 // pred_check_branch
          %216 = sbr.rel (%p214) target = $region36
        $region35: #{tpu_custom_call.1} parent=31 // pred_region
          %217 = dma.done %s210, 128
        $region36: #{tpu_custom_call.1} parent=31 // pred_fallthru
          _
        %s218 = sand.u32 %s71, 1
        %s219 = scalar_lea.sflag [#allocation7], %s218
        %s220 = sand.u32 %s71, 1
        %s221 = smul.addr %s220, 128
        %s222 = scalar_lea.vmem [#allocation6], %s221
        // Predicated region
        $region37: #{tpu_custom_call.1} parent=31 // pred_check
          %p223 = pneg %p84
        $region38: #{tpu_custom_call.1} parent=31 // pred_check_branch
          %225 = sbr.rel (%p223) target = $region40
        $region39: #{tpu_custom_call.1} parent=31 // pred_region
          %226 = dma.done %s219, 2048
        $region40: #{tpu_custom_call.1} parent=31 // pred_fallthru
          _
        %s227 = sand.u32 %s43, 1
        %s228 = scalar_lea.sflag [#allocation4], %s227
        %s229 = sand.u32 %s43, 1
        %s230 = smul.addr %s229, 8
        %s231 = scalar_lea.vmem [#allocation3], %s230
        %p232 = pneg %p56
        %p233 = pneg %p53
        %s234 = sand.u32 %s71, 1
        %s235 = scalar_lea.sflag [#allocation7], %s234
        %s236 = sand.u32 %s71, 1
        %s237 = smul.addr %s236, 128
        %s238 = scalar_lea.vmem [#allocation6], %s237
        %p239 = pneg %p84
        %p240 = pneg %p81
        %p241 = scmp.lt.s32.totalorder %s27, 1
        %s242 = scalar_select %p241, %s27, 1
        %s243 = scalar_lea.vmem %s2, %s242
        %p244 = pneg %p110
        %p245 = pneg %p107
        %p246 = pneg %p136
        %p247 = pneg %p133
        %s248 = sand.u32 %s123, 1
        %s249 = scalar_lea.sflag [#allocation5], %s248
        %s250 = sand.u32 %s123, 1
        %s251 = smul.addr %s250, 8
        %s252 = scalar_lea.vmem [#allocation8], %s251
        %s253 = smul.u32 16, %s28
        %p254 = scmp.lt.s32.totalorder %s27, 1
        %s255 = scalar_select %p254, %s27, 1
        %s256 = scalar_lea.vmem %s2, %s255
        %p257 = scmp.eq.s32.totalorder %s28, 0
        // Predicated region
        $region41: #{tpu_custom_call.1} parent=31 // pred_check
          %p258 = pneg %p257
        $region42: #{tpu_custom_call.1} parent=31 // pred_check_branch
          %260 = sbr.rel (%p258) target = $region44
        $region43: #{tpu_custom_call.1} parent=31 // pred_region
          %261 = vst [vmem:[#allocation2] sm:$0xff] 0.0
        $region44: #{tpu_custom_call.1} parent=31 // pred_fallthru
          _
        %v262 = vld [vmem:[#allocation2] sm:$0xff]
        %v263 = vld [vmem:[%s213] sm:$0xff]
        %v264 = vld [vmem:[%s222] sm:$0xff]
        %v265 = vld [vmem:[%s222 + $0x8] sm:$0xff]
        %v266 = vld [vmem:[%s222 + $0x10] sm:$0xff]
        %v267 = vld [vmem:[%s222 + $0x18] sm:$0xff]
        %v268 = vld [vmem:[%s222 + $0x20] sm:$0xff]
        %v269 = vld [vmem:[%s222 + $0x28] sm:$0xff]
        %v270 = vld [vmem:[%s222 + $0x30] sm:$0xff]
        %v271 = vld [vmem:[%s222 + $0x38] sm:$0xff]
        %v272 = vld [vmem:[%s222 + $0x40] sm:$0xff]
        %v273 = vld [vmem:[%s222 + $0x48] sm:$0xff]
        %v274 = vld [vmem:[%s222 + $0x50] sm:$0xff]
        %v275 = vld [vmem:[%s222 + $0x58] sm:$0xff]
        %v276 = vld [vmem:[%s222 + $0x60] sm:$0xff]
        %v277 = vld [vmem:[%s222 + $0x68] sm:$0xff]
        %v278 = vld [vmem:[%s222 + $0x70] sm:$0xff]
        %v279 = vld [vmem:[%s222 + $0x78] sm:$0xff]
        %280 = vmatprep.subr.mxu0 0.0
        %281 = vmatpush1.msra.mxu0 %v279
        %282 = vmatprep.subr.mxu0 0.0
        %283 = vmatpush1.msra.mxu0 %v278
        %284 = vmatprep.subr.mxu0 0.0
        %285 = vmatpush1.msra.mxu0 %v277
        %286 = vmatprep.subr.mxu0 0.0
        %287 = vmatpush1.msra.mxu0 %v276
        %288 = vmatprep.subr.mxu0 0.0
        %289 = vmatpush1.msra.mxu0 %v275
        %290 = vmatprep.subr.mxu0 0.0
        %291 = vmatpush1.msra.mxu0 %v274
        %292 = vmatprep.subr.mxu0 0.0
        %293 = vmatpush1.msra.mxu0 %v273
        %294 = vmatprep.subr.mxu0 0.0
        %295 = vmatpush1.msra.mxu0 %v272
        %296 = vmatprep.subr.mxu0 0.0
        %297 = vmatpush1.msra.mxu0 %v271
        %298 = vmatprep.subr.mxu0 0.0
        %299 = vmatpush1.msra.mxu0 %v270
        %300 = vmatprep.subr.mxu0 0.0
        %301 = vmatpush1.msra.mxu0 %v269
        %302 = vmatprep.subr.mxu0 0.0
        %303 = vmatpush1.msra.mxu0 %v268
        %304 = vmatprep.subr.mxu0 0.0
        %305 = vmatpush1.msra.mxu0 %v267
        %306 = vmatprep.subr.mxu0 0.0
        %307 = vmatpush1.msra.mxu0 %v266
        %308 = vmatprep.subr.mxu0 0.0
        %309 = vmatpush1.msra.mxu0 %v265
        %310 = vmatprep.subr.mxu0 0.0
        %311 = vmatpush1.msra.mxu0 %v264
        %312 = vmatprep.subr.mxu0 0.0
        %313 = vmatpush2.msra.mxu0 0.0
        %314 = vmatprep.subr.mxu0 0.0
        %315 = vmatpush2.msra.mxu0 0.0
        %316 = vmatprep.subr.mxu0 0.0
        %317 = vmatpush2.msra.mxu0 0.0
        %318 = vmatprep.subr.mxu0 0.0
        %319 = vmatpush2.msra.mxu0 0.0
        %320 = vmatprep.subr.mxu0 0.0
        %321 = vmatpush2.msra.mxu0 0.0
        %322 = vmatprep.subr.mxu0 0.0
        %323 = vmatpush2.msra.mxu0 0.0
        %324 = vmatprep.subr.mxu0 0.0
        %325 = vmatpush2.msra.mxu0 0.0
        %326 = vmatprep.subr.mxu0 0.0
        %327 = vmatpush2.msra.mxu0 0.0
        %328 = vmatprep.subr.mxu0 0.0
        %329 = vmatpush2.msra.mxu0 0.0
        %330 = vmatprep.subr.mxu0 0.0
        %331 = vmatpush2.msra.mxu0 0.0
        %332 = vmatprep.subr.mxu0 0.0
        %333 = vmatpush2.msra.mxu0 0.0
        %334 = vmatprep.subr.mxu0 0.0
        %335 = vmatpush2.msra.mxu0 0.0
        %336 = vmatprep.subr.mxu0 0.0
        %337 = vmatpush2.msra.mxu0 0.0
        %338 = vmatprep.subr.mxu0 0.0
        %339 = vmatpush2.msra.mxu0 0.0
        %340 = vmatprep.subr.mxu0 0.0
        %341 = vmatpush2.msra.mxu0 0.0
        %342 = vmatprep.subr.mxu0 0.0
        %343 = vmatpush2.msra.mxu0 0.0
        %344 = vmatprep.mubr.f32.mxu0 0.0
        %345 = vmatmul.mubr.f32.gmra.mxu0 %v263
        %v346 = vpop.f32.mrf.mxu0
        %v347 = vadd.f32 0.0, %v346
        %v348 = vpop.f32.mrf.mxu0
        %349 = vdwg.mxu0
        %v350 = vadd.f32 %v262, %v347
        %351 = vst [vmem:[#allocation2] sm:$0xff] %v350
        %p352 = scmp.eq.s32.totalorder %s28, 1
        // Predicated region
        $region45: #{tpu_custom_call.1} parent=31 // pred_check
          %p353 = pneg %p352
        $region46: #{tpu_custom_call.1} parent=31 // pred_check_branch
          %355 = sbr.rel (%p353) target = $region48
        $region47: #{tpu_custom_call.1} parent=31 // pred_region
          %v356 = vld [vmem:[#allocation2] sm:$0xff]
          %v357 = vld [vmem:[%s256] sm:$0x1]
          %v359 = vlaneseq
          %v360 = vshrl.u32 %v359, 7
          %v361 = vsub.s32 0, %v360
          %v362 = vrot.slane %v357, %v361
          %v364 = vadd.f32 %v356, %v362
          %v365 = vtanh.pop %v364
          %366 = vst [vmem:[%s252] sm:$0xff] %v365
        $region48: #{tpu_custom_call.1} parent=31 // pred_fallthru
          _
        %s367 = sand.u32 %s123, 1
        %s368 = scalar_lea.sflag [#allocation5], %s367
        %s369 = sand.u32 %s123, 1
        %s370 = smul.addr %s369, 8
        %s371 = scalar_lea.vmem [#allocation8], %s370
        // Predicated region
        $region49: #{tpu_custom_call.1} parent=31 // pred_check
          %p372 = pneg %p133
        $region50: #{tpu_custom_call.1} parent=31 // pred_check_branch
          %374 = sbr.rel (%p372) target = $region52
        $region51: #{tpu_custom_call.1} parent=31 // pred_region
          %s376 = ssub.s32 128, 128
          %377 = vsyncadd %s368, %s376
          %s378 = smul.addr %s27, 128
          %s379 = scalar_lea.hbm %s3, %s378
          %s381 = sshll.u32 %s371, 4
          %s382 = int_to_ptr.vmem [resolvable:$true] %s381
          %384 = dma.vmem_to_hbm [thread:$0]  %s382, 128, %s379, %s368
        $region52: #{tpu_custom_call.1} parent=31 // pred_fallthru
          _
      $region32: #{tpu_custom_call.1} parent=5 // pred_fallthru
        _
      %p385 = scmp.le.s32.totalorder 2, %s18
      // Predicated region
      $region53: #{tpu_custom_call.1} parent=5 // pred_check
        %p386 = pneg %p385
      $region54: #{tpu_custom_call.1} parent=5 // pred_check_branch
        %388 = sbr.rel (%p386) target = $region56
      $region55: #{tpu_custom_call.1} parent=5 // pred_region
        %s389 = ssub.s32 %s18, 2
        // Predicated region
        $region57: #{tpu_custom_call.1} parent=55 // pred_check
          %p390 = pneg %p139
        $region58: #{tpu_custom_call.1} parent=55 // pred_check_branch
          %392 = sbr.rel (%p390) target = $region60
        $region59: #{tpu_custom_call.1} parent=55 // pred_region
          %s393 = sand.u32 %s124, 1
          %s394 = scalar_lea.sflag [#allocation5], %s393
          %s395 = sand.u32 %s124, 1
          %s396 = smul.addr %s395, 8
          %s397 = scalar_lea.vmem [#allocation8], %s396
          %398 = dma.done %s394, 128
        $region60: #{tpu_custom_call.1} parent=55 // pred_fallthru
          _
      $region56: #{tpu_custom_call.1} parent=5 // pred_fallthru
        _
    $region6: #{tpu_custom_call.1} parent=1 // loop_footer
      %s22 = sadd.s32 1, %s18
    $region7: #{tpu_custom_call.1} parent=1 // loop_footer_branch
      %17 = sbr.rel target = $region3
    $region8: #{tpu_custom_call.1} parent=1 // loop_exit
      _
    %399 = vsyncpa [#allocation4], 1
    %s400 = scalar_lea.sflag [#allocation4], 1
    %401 = vsyncpa %s400, 1
    %402 = vsyncpa [#allocation7], 1
    %s403 = scalar_lea.sflag [#allocation7], 1
    %404 = vsyncpa %s403, 1
    %405 = vsyncpa [#allocation5], 1
    %s406 = scalar_lea.sflag [#allocation5], 1
    %407 = vsyncpa %s406, 1

</llo_original>
